<compile_context>
chip_gen: v5e
topology: v5e:2x2
jax: 0.10.0
libtpu: 0.0.40
codegen_flags: <defaults>
</compile_context>

<pallas_src>
import functools

import jax
import jax.numpy as jnp
from jax.experimental import pallas as pl
from jax.experimental.pallas import tpu as pltpu


def _round_up(n, m):
    return ((n + m - 1) // m) * m


def _pick_row_tile(n):
    # v7x: keep <= 128 (64 MiB physical VMEM); v6e can use 256-512 via row_tile=.
    return 128 if n >= 128 else 8


# ----------------------------- Pallas kernels ------------------------------

def _linear_kernel(x_ref, w_ref, b_ref, o_ref, *, relu):
    # y = x @ W + b  (W is pre-transposed vs. torch's nn.Linear [out,in])
    y = jnp.dot(x_ref[...], w_ref[...], preferred_element_type=jnp.float32)
    y = y + b_ref[...]
    if relu:
        y = jnp.maximum(y, 0.0)
    o_ref[...] = y


def linear(x, w, b, relu=False, row_tile=None):
    # x: [N, Din], w: [Din, Dout], b: [1, Dout] -- row-tiled grid, weights resident.
    n, din = x.shape
    dout = w.shape[1]
    if row_tile is None:
        row_tile = _pick_row_tile(n)
    n_pad = _round_up(n, row_tile)
    xp = jnp.pad(x, ((0, n_pad - n), (0, 0)))
    out = pl.pallas_call(
        functools.partial(_linear_kernel, relu=relu),
        out_shape=jax.ShapeDtypeStruct((n_pad, dout), jnp.float32),
        grid_spec=pltpu.PrefetchScalarGridSpec(
            num_scalar_prefetch=0,
            grid=(n_pad // row_tile,),
            in_specs=[pl.BlockSpec((row_tile, din), lambda i: (i, 0)),
                      pl.BlockSpec((din, dout), lambda i: (0, 0)),
                      pl.BlockSpec((1, dout), lambda i: (0, 0))],
            out_specs=pl.BlockSpec((row_tile, dout), lambda i: (i, 0)),
        ),
        compiler_params=pltpu.CompilerParams(dimension_semantics=("parallel",)),
    )(xp, w, b)
    return out[:n]


def _rgcn_gg_layer_kernel(a_ref, invin_ref, b_ref, gate_ref, xfull_ref,
                          xrows_ref, w_ref, o_ref, *, num_relations, hidden):
    R, H = num_relations, hidden
    x_full = xfull_ref[...]                          # [N, H]  f32  (resident)
    x_bf16 = x_full.astype(jnp.bfloat16)             # MXU rhs for bf16 counts
    x_v = xrows_ref[...]                             # [Tv, H] f32  (this row tile)

    # ---- relation aggregation (PyG 'mean'):  h_r = (A_r_counts @ x) / max(indeg_r, 1)
    parts = [x_v]
    for r in range(R):                               # static unroll
        h_r = jnp.dot(a_ref[r], x_bf16, preferred_element_type=jnp.float32)
        parts.append(h_r * invin_ref[r])             # f32 post-matmul normalisation
    h_cat = jnp.concatenate(parts, axis=1)           # [Tv, (R+1)*H]  (K = 128 for R=3,H=32)

    # ---- fused RGCN (+ optional gg) weight matmul: ONE K=(R+1)*H MXU call.
    out = jnp.dot(h_cat, w_ref[...], preferred_element_type=jnp.float32)  # [Tv, H or 2H]
    x_rgcn = jnp.maximum(out[:, :H], 0.0)            # relu(rgcn_layers[i](x, ...))
    # Columns H:2H (if present) are the gg branch: computed then discarded,
    # exactly matching the reference module (x_hat is never consumed).

    # ---- gating: tau = tanh(scatter_mean(|x[src]-x[dst]|^2, src)), p == 2 expansion,
    #      with bx / bx2 fused into one  B_counts @ [x | x^2]  matmul.
    xcat = jnp.concatenate([x_full, x_full * x_full], axis=1).astype(jnp.bfloat16)
    bxx = jnp.dot(b_ref[...], xcat, preferred_element_type=jnp.float32)   # [Tv, 2H]
    has_out = gate_ref[:, 0:1]                        # 1.0 iff node has outgoing edges
    inv_out = gate_ref[:, 1:2]                        # 1 / max(out_degree, 1)  (precomputed)
    bx = bxx[:, :H] * inv_out
    bx2 = bxx[:, H:] * inv_out
    mean = has_out * (x_v * x_v) - 2.0 * x_v * bx + bx2
    tau = jnp.tanh(mean)                              # deg==0 -> mean==0 -> tau==0

    o_ref[...] = (1.0 - tau) * x_v + tau * x_rgcn     # f32 blend (v5e-friendly)


def rgcn_gg_layer(x, a_cnt, inv_in, b_cnt, gate, w_stack, *, row_tile):
    n_pad, h = x.shape
    r = a_cnt.shape[0]
    h_out = w_stack.shape[1]
    grid = (n_pad // row_tile,)
    kernel = functools.partial(_rgcn_gg_layer_kernel, num_relations=r, hidden=h)

    flops = (2 * r * n_pad * n_pad * h            # A_r @ x
             + 2 * n_pad * n_pad * 2 * h          # B @ [x | x^2]
             + 2 * n_pad * (r + 1) * h * h_out)   # stacked weight matmul
    bytes_accessed = (a_cnt.size * 2 + b_cnt.size * 2 + inv_in.size * 4
                      + gate.size * 4 + 2 * x.size * 4 + w_stack.size * 4
                      + n_pad * h * 4)
    cost = pl.CostEstimate(flops=flops, transcendentals=n_pad * h,
                           bytes_accessed=bytes_accessed)

    # Double-buffered per-step working set (the A/B row tiles dominate); only
    # raise the scoped VMEM limit when the default would force smaller tiles.
    step_bytes = 2 * (r * row_tile * n_pad * 2 + row_tile * n_pad * 2) + x.size * 4
    vmem_limit = 64 * 1024 * 1024 if step_bytes > 24 * 1024 * 1024 else None

    return pl.pallas_call(
        kernel,
        out_shape=jax.ShapeDtypeStruct((n_pad, h), jnp.float32),
        grid_spec=pltpu.PrefetchScalarGridSpec(
            num_scalar_prefetch=0,
            grid=grid,
            in_specs=[
                pl.BlockSpec((r, row_tile, n_pad), lambda i: (0, i, 0)),   # A counts (bf16)
                pl.BlockSpec((r, row_tile, 1), lambda i: (0, i, 0)),       # 1/max(indeg_r,1)
                pl.BlockSpec((row_tile, n_pad), lambda i: (i, 0)),         # B counts (bf16)
                pl.BlockSpec((row_tile, 2), lambda i: (i, 0)),             # [has_out, inv_out]
                pl.BlockSpec((n_pad, h), lambda i: (0, 0)),                # x (resident)
                pl.BlockSpec((row_tile, h), lambda i: (i, 0)),             # x rows of this tile
                pl.BlockSpec(((r + 1) * h, h_out), lambda i: (0, 0)),      # stacked weights
            ],
            out_specs=pl.BlockSpec((row_tile, h), lambda i: (i, 0)),
        ),
        compiler_params=pltpu.CompilerParams(
            dimension_semantics=("parallel",),      # row tiles are independent
            vmem_limit_bytes=vmem_limit,
        ),
        cost_estimate=cost,
    )(a_cnt, inv_in, b_cnt, gate, x, x, w_stack)


# ------------------------------- glue (JAX) --------------------------------

def build_graph_operators(edge_index, edge_type, num_relations, n_pad):
    src, dst = edge_index[0], edge_index[1]
    a = jnp.zeros((num_relations, n_pad, n_pad), jnp.float32)
    a = a.at[edge_type, dst, src].add(1.0)            # incoming counts per relation
    indeg = a.sum(axis=-1, keepdims=True)             # [R, n_pad, 1]
    inv_in = 1.0 / jnp.maximum(indeg, 1.0)            # f32 'mean' normalisation factors
    b = jnp.zeros((n_pad, n_pad), jnp.float32).at[src, dst].add(1.0)
    outdeg = b.sum(axis=-1, keepdims=True)
    gate = jnp.concatenate([(outdeg > 0).astype(jnp.float32),
                            1.0 / jnp.maximum(outdeg, 1.0)], axis=1)      # [n_pad, 2]
    # Counts are small integers -> exact in bf16; halves HBM/VMEM for the O(N^2) operands.
    return a.astype(jnp.bfloat16), inv_in, b.astype(jnp.bfloat16), gate


def init_params(key, node_types, in_dims, hidden_dim, out_dim,
                num_relations, num_bases, num_layers):
    keys = iter(jax.random.split(key, 128))
    nrm = lambda shape: 0.1 * jax.random.normal(next(keys), shape, jnp.float32)
    params = {"proj": {}, "rgcn": [], "gg": []}
    for t in node_types:
        params["proj"][t] = {"w": nrm((in_dims[t], hidden_dim)),
                             "b": nrm((1, hidden_dim))}
    for _ in range(num_layers):
        for name in ("rgcn", "gg"):
            params[name].append({
                "basis": nrm((num_bases, hidden_dim, hidden_dim)),
                "comp": nrm((num_relations, num_bases)),
                "root": nrm((hidden_dim, hidden_dim)),
            })
    params["out"] = {"w": nrm((hidden_dim, out_dim)), "b": nrm((1, out_dim))}
    return params


def _stack_weights(layer_params, num_relations, hidden_dim):
    # basis decomposition W_r = sum_b comp[r, b] * basis[b]; stack [W_root; W_1; ..; W_R].
    w_rel = jnp.einsum("rb,bio->rio", layer_params["comp"], layer_params["basis"])
    stacked = jnp.concatenate([layer_params["root"][None], w_rel], axis=0)
    return stacked.reshape((num_relations + 1) * hidden_dim, hidden_dim)


def gg_rgcn_forward(params, x_dict, edge_index, edge_type, node_types,
                    num_layers, num_relations, p=2, compute_gg=True, row_tile=None):
    # TODO(synk): general p != 2 needs a per-edge gather; p == 2 (the default)
    # is expanded algebraically into MXU-friendly matmuls.
    assert p == 2

    # input projections + relu (per node type), then concat in node_types order
    xs = [linear(x_dict[t], params["proj"][t]["w"], params["proj"][t]["b"], relu=True)
          for t in node_types]
    x = jnp.concatenate(xs, axis=0)
    n, h = x.shape

    if row_tile is None:
        row_tile = _pick_row_tile(n)
    n_pad = _round_up(n, row_tile)
    x = jnp.pad(x, ((0, n_pad - n), (0, 0)))          # padded rows stay exactly zero
    a_cnt, inv_in, b_cnt, gate = build_graph_operators(edge_index, edge_type,
                                                       num_relations, n_pad)

    x_latents = []
    for i in range(num_layers):
        w_stack = _stack_weights(params["rgcn"][i], num_relations, h)
        if compute_gg:
            # Fuse the gg branch as extra output columns of the same stacked matmul
            # (computed then discarded, as in the reference).  Set compute_gg=False
            # to drop it entirely.
            gg_stack = _stack_weights(params["gg"][i], num_relations, h)
            w_stack = jnp.concatenate([w_stack, gg_stack], axis=1)   # [(R+1)H, 2H]
        x = rgcn_gg_layer(x, a_cnt, inv_in, b_cnt, gate, w_stack, row_tile=row_tile)
        x_latents.append(x[:n])

    out = linear(x[:n], params["out"]["w"], params["out"]["b"], relu=False)
    return out, x_latents


# --------------------------------- main -------------------------------------

if __name__ == "__main__":
    hidden_dim = 32
    out_dim = 8
    num_bases = 2
    num_layers = 2
    p = 2

    node_types = ("author", "paper")
    edge_types = ("writes", "cites", "rev_writes")     # metadata[1]
    num_relations = len(edge_types)
    in_dims = {"author": 12, "paper": 20}
    num_nodes_per_type = {"author": 8, "paper": 8}
    N = sum(num_nodes_per_type.values())
    E = 40

    key = jax.random.PRNGKey(0)
    k_feat_a, k_feat_p, k_src, k_dst, k_et, k_params = jax.random.split(key, 6)
    x_dict = {
        "author": jax.random.normal(k_feat_a, (num_nodes_per_type["author"],
                                                in_dims["author"]), jnp.float32),
        "paper": jax.random.normal(k_feat_p, (num_nodes_per_type["paper"],
                                              in_dims["paper"]), jnp.float32),
    }
    edge_index = jnp.stack([
        jax.random.randint(k_src, (E,), 0, N, dtype=jnp.int32),
        jax.random.randint(k_dst, (E,), 0, N, dtype=jnp.int32),
    ], axis=0)
    edge_type = jax.random.randint(k_et, (E,), 0, num_relations, dtype=jnp.int32)

    params = init_params(k_params, node_types, in_dims, hidden_dim, out_dim,
                         num_relations, num_bases, num_layers)

    out, x_latents = gg_rgcn_forward(params, x_dict, edge_index, edge_type,
                                     node_types, num_layers, num_relations, p=p)
    jax.block_until_ready((out, x_latents))
    assert out.shape == (N, out_dim)
    assert len(x_latents) == num_layers and x_latents[0].shape == (N, hidden_dim)
    assert bool(jnp.all(jnp.isfinite(out)))
    print("KERNEL_OK")
</pallas_src>

<mosaic_0001>
module attributes {stable_mosaic.version = 11 : i64} {
  func.func @_linear_kernel(%arg0: i32, %arg1: memref<8x12xf32, #tpu.memory_space<vmem>>, %arg2: memref<12x32xf32, #tpu.memory_space<vmem>>, %arg3: memref<1x32xf32, #tpu.memory_space<vmem>>, %arg4: memref<8x32xf32, #tpu.memory_space<vmem>>) attributes {dimension_semantics = [#tpu.dimension_semantics<parallel>], iteration_bounds = array<i64: 1>, scalar_prefetch = 0 : i64, scratch_operands = 0 : i64, tpu.core_type = #tpu.core_type<tc>, window_params = [{transform_indices = @transform_0, window_bounds = array<i64: 8, 12>}, {pipeline_mode = #tpu.pipeline_mode<synchronous>, transform_indices = @transform_1, window_bounds = array<i64: 12, 32>}, {pipeline_mode = #tpu.pipeline_mode<synchronous>, transform_indices = @transform_2, window_bounds = array<i64: 1, 32>}, {transform_indices = @transform_3, window_bounds = array<i64: 8, 32>}]} {
    %c0 = arith.constant 0 : index
    %c0_0 = arith.constant 0 : index
    %0 = vector.load %arg1[%c0, %c0_0] : memref<8x12xf32, #tpu.memory_space<vmem>>, vector<8x12xf32>
    %c0_1 = arith.constant 0 : index
    %c0_2 = arith.constant 0 : index
    %1 = vector.load %arg2[%c0_1, %c0_2] : memref<12x32xf32, #tpu.memory_space<vmem>>, vector<12x32xf32>
    %cst = arith.constant dense<0.000000e+00> : vector<8x32xf32>
    %2 = tpu.matmul %0, %1, %cst {dimension_numbers = #tpu.dot_dimension_numbers<[1], [0], [0], [1], [0, 0, 1, 1], [], []>} : vector<8x12xf32>, vector<12x32xf32>, vector<8x32xf32> -> vector<8x32xf32>
    %c0_3 = arith.constant 0 : index
    %c0_4 = arith.constant 0 : index
    %3 = vector.load %arg3[%c0_3, %c0_4] : memref<1x32xf32, #tpu.memory_space<vmem>>, vector<1x32xf32>
    %4 = vector.broadcast %3 : vector<1x32xf32> to vector<8x32xf32>
    %5 = arith.addf %2, %4 : vector<8x32xf32>
    %cst_5 = arith.constant 0.000000e+00 : f32
    %6 = vector.broadcast %cst_5 : f32 to vector<8x32xf32>
    %7 = arith.maximumf %5, %6 : vector<8x32xf32>
    %c0_6 = arith.constant 0 : index
    %c0_7 = arith.constant 0 : index
    %8 = vector.load %arg4[%c0_6, %c0_7] : memref<8x32xf32, #tpu.memory_space<vmem>>, vector<8x32xf32>
    tpu.vector_store %arg4[%c0_6, %c0_7], %7 {strides = array<i32>} : memref<8x32xf32, #tpu.memory_space<vmem>>, vector<8x32xf32>,
    return
  }
  func.func @transform_0(%arg0: i32) -> (i32, i32) {
    %c0_i32 = arith.constant 0 : i32
    %c0_i32_0 = arith.constant 0 : i32
    return %arg0, %c0_i32 : i32, i32
  }
  func.func @transform_1(%arg0: i32) -> (i32, i32) {
    %c0_i32 = arith.constant 0 : i32
    %c0_i32_0 = arith.constant 0 : i32
    %c0_i32_1 = arith.constant 0 : i32
    return %c0_i32, %c0_i32_0 : i32, i32
  }
  func.func @transform_2(%arg0: i32) -> (i32, i32) {
    %c0_i32 = arith.constant 0 : i32
    %c0_i32_0 = arith.constant 0 : i32
    %c0_i32_1 = arith.constant 0 : i32
    return %c0_i32, %c0_i32_0 : i32, i32
  }
  func.func @transform_3(%arg0: i32) -> (i32, i32) {
    %c0_i32 = arith.constant 0 : i32
    %c0_i32_0 = arith.constant 0 : i32
    return %arg0, %c0_i32 : i32, i32
  }
}

</mosaic_0001>

<llo_original>
// kernel: tpu_custom_call.1
$region0: #{tpu_custom_call.1}
  #allocation0 [shape = 'u32[]', space=smem, size = 0x4, offset = 0x4, fixed_abs, tag = 'smem constant byte address 0x4 - core index']
  #allocation1 [shape = 'u32[72,128]{1,0:T(1,128)}', space=vmem, size = 0x9000, scoped, tag = 'internal scratch']
  %s0 = inlined_call_operand.hbm [shape: f32[8,12], index: 0, kind: input, shape index: {}]
  %s1 = inlined_call_operand.hbm [shape: f32[12,32], index: 1, kind: input, shape index: {}]
  %s2 = inlined_call_operand.vmem [shape: f32[1,32], index: 2, kind: input, shape index: {}]
  %s3 = inlined_call_operand.hbm [shape: f32[8,32], index: 3, kind: output, shape index: {}]
  %s4 = sld [smem:[#allocation0]]
  $region30: #{tpu_custom_call.1} parent=0
    _
  %s6 = ssub.s32 1, %s4
  %s7 = scalar_select 0, %s6, %s4
  $region1: #{tpu_custom_call.1} parent=0
    #allocation2 [shape = 'u8[4096]{0}', space=vmem, size = 0x1000, scoped, tag = 'input window, operand 0, single buffered']
    #allocation3 [shape = 's32[1]{0}', space=sflag, size = 0x4, scoped, tag = 'scoped memory for tpu_custom_call.1']
    #allocation4 [shape = 's32[1]{0}', space=sflag, size = 0x4, scoped, tag = 'scoped memory for tpu_custom_call.1']
    #allocation5 [shape = 'u8[8192]{0}', space=vmem, size = 0x2000, scoped, tag = 'input window, operand 1, single buffered']
    #allocation6 [shape = 's32[1]{0}', space=sflag, size = 0x4, scoped, tag = 'scoped memory for tpu_custom_call.1']
    #allocation7 [shape = 'u8[4096]{0}', space=vmem, size = 0x1000, scoped, tag = 'output window, operand 0, single buffered']
    %8 = vsyncpa [#allocation3], 0
    %9 = vsyncpa [#allocation6], 0
    %10 = vsyncpa [#allocation4], 0
    // Predicated region
    $region2: #{tpu_custom_call.1} parent=1 // pred_check
      _
    $region3: #{tpu_custom_call.1} parent=1 // pred_check_branch
      %12 = sbr.rel (0) target = $region5
    $region4: #{tpu_custom_call.1} parent=1 // pred_region
      %14 = vsyncadd [#allocation3], 0
      %s16 = sshll.u32 %s0, 4
      %s17 = int_to_ptr.hbm [resolvable:$true] %s16
      %s18 = sshll.u32 [#allocation2], 4
      %s19 = int_to_ptr.vmem [resolvable:$true] %s18
      %21 = dma.hbm_to_vmem [thread:$0]  %s17, 128, %s19, [#allocation3]
    $region5: #{tpu_custom_call.1} parent=1 // pred_fallthru
      _
    // Predicated region
    $region6: #{tpu_custom_call.1} parent=1 // pred_check
      _
    $region7: #{tpu_custom_call.1} parent=1 // pred_check_branch
      %23 = sbr.rel (0) target = $region9
    $region8: #{tpu_custom_call.1} parent=1 // pred_region
      %25 = vsyncadd [#allocation6], 0
      %s26 = sshll.u32 %s1, 4
      %s27 = int_to_ptr.hbm [resolvable:$true] %s26
      %s28 = sshll.u32 [#allocation5], 4
      %s29 = int_to_ptr.vmem [resolvable:$true] %s28
      %34 = dma.hbm_to_vmem [thread:$0]  %s27, 256, %s29, [#allocation6], 128, 128, 8
    $region9: #{tpu_custom_call.1} parent=1 // pred_fallthru
      _
    // Predicated region
    $region10: #{tpu_custom_call.1} parent=1 // pred_check
      _
    $region11: #{tpu_custom_call.1} parent=1 // pred_check_branch
      %36 = sbr.rel (0) target = $region13
    $region12: #{tpu_custom_call.1} parent=1 // pred_region
      _
    $region13: #{tpu_custom_call.1} parent=1 // pred_fallthru
      _
    // Predicated region
    $region14: #{tpu_custom_call.1} parent=1 // pred_check
      _
    $region15: #{tpu_custom_call.1} parent=1 // pred_check_branch
      %38 = sbr.rel (0) target = $region17
    $region16: #{tpu_custom_call.1} parent=1 // pred_region
      %40 = dma.done [#allocation3], 128
    $region17: #{tpu_custom_call.1} parent=1 // pred_fallthru
      _
    // Predicated region
    $region18: #{tpu_custom_call.1} parent=1 // pred_check
      _
    $region19: #{tpu_custom_call.1} parent=1 // pred_check_branch
      %42 = sbr.rel (0) target = $region21
    $region20: #{tpu_custom_call.1} parent=1 // pred_region
      %44 = dma.done [#allocation6], 256
    $region21: #{tpu_custom_call.1} parent=1 // pred_fallthru
      _
    %v45 = vld [vmem:[#allocation2] sm:$0xff]
    %v46 = vld [vmem:[#allocation5] sm:$0xff]
    %v47 = vld [vmem:[#allocation5 + $0x8] sm:$0xf]
    %v48 = vld [vmem:[%s2] sm:$0x1]
    %v50 = vperm.slane %v48, 0
    %vm52 = vcmask 97280
    %v54 = vsel %vm52, %v45, 0
    %vm56 = vcmask 1043456
    %v58 = vsel %vm56, %v47, 0
    %60 = vmatpush.msra.mxu0 0.0
    %61 = vmatpush.msra.mxu0 0.0
    %62 = vmatpush.msra.mxu0 0.0
    %63 = vmatpush.msra.mxu0 0.0
    %64 = vmatpush.msra.mxu0 0.0
    %65 = vmatpush.msra.mxu0 0.0
    %66 = vmatpush.msra.mxu0 0.0
    %67 = vmatpush.msra.mxu0 0.0
    %68 = vmatpush.msra.mxu0 0.0
    %69 = vmatpush.msra.mxu0 0.0
    %70 = vmatpush.msra.mxu0 0.0
    %71 = vmatpush.msra.mxu0 0.0
    %72 = vmatpush.msra.mxu0 0.0
    %73 = vmatpush.msra.mxu0 0.0
    %74 = vmatpush.msra.mxu0 %v58
    %75 = vmatpush.msra.mxu0 %v46
    %76 = vmatmul.f32.gmra.mxu0 %v54
    %v77 = vpop.f32.mrf.mxu0
    %v78 = vadd.f32 %v50, %v77
    %79 = vdwg.mxu0
    %v80 = vmax.f32 %v78, 0.0
    %vm81 = vcmask 261120
    %82 = vst.msk [vmem:[#allocation7] sm:$0xff] %vm81, %v80
    // Predicated region
    $region22: #{tpu_custom_call.1} parent=1 // pred_check
      _
    $region23: #{tpu_custom_call.1} parent=1 // pred_check_branch
      %84 = sbr.rel (0) target = $region25
    $region24: #{tpu_custom_call.1} parent=1 // pred_region
      %86 = vsyncadd [#allocation4], 0
      %s88 = sshll.u32 [#allocation7], 4
      %s89 = int_to_ptr.vmem [resolvable:$true] %s88
      %s90 = sshll.u32 %s3, 4
      %s91 = int_to_ptr.hbm [resolvable:$true] %s90
      %93 = dma.vmem_to_hbm [thread:$0]  %s89, 128, %s91, [#allocation4]
    $region25: #{tpu_custom_call.1} parent=1 // pred_fallthru
      _
    // Predicated region
    $region26: #{tpu_custom_call.1} parent=1 // pred_check
      _
    $region27: #{tpu_custom_call.1} parent=1 // pred_check_branch
      %95 = sbr.rel (0) target = $region29
    $region28: #{tpu_custom_call.1} parent=1 // pred_region
      %97 = dma.done [#allocation4], 128
    $region29: #{tpu_custom_call.1} parent=1 // pred_fallthru
      _
    %98 = vsyncpa [#allocation3], 1
    %99 = vsyncpa [#allocation6], 1
    %100 = vsyncpa [#allocation4], 1

</llo_original>
